<compile_context>
chip_gen: v5e
topology: v5e:2x2
jax: 0.10.0
libtpu: 0.0.40
codegen_flags: <defaults>
</compile_context>

<pallas_src>
import functools
import math

import jax
import jax.numpy as jnp
from jax.experimental import pallas as pl
from jax.experimental.pallas import tpu as pltpu

_TARGET_TILE_BYTES = 6 * 1024 * 1024      # per x/out block
_VMEM_LIMIT_BYTES = 40 * 1024 * 1024      # double-buffered x+out+pe, safe on v5e/v6e/v7x
_MEGACORE_SPLIT_BYTES = 2 * 1024 * 1024   # above this, force >= 2 grid steps (v7x 2 TCs)


def _sublane_pack(dtype) -> int:
    """Native sublane packing: 8 for 4-byte, 16 for 2-byte, 32 for 1-byte dtypes."""
    return max(8, 32 // max(1, jnp.dtype(dtype).itemsize))


def _round_up(x: int, m: int) -> int:
    return ((x + m - 1) // m) * m


def _choose_tile(full: int, max_elems: int, pack: int) -> int:
    """Largest tile <= max_elems that is a multiple of `pack` (or the full extent)."""
    if max_elems >= full or full <= pack:
        return full
    return max(pack, (max_elems // pack) * pack)


def make_positional_encoding(d_model: int, seq_len: int, dtype=jnp.float32):
    """Deterministic buffer construction (same math as the torch __init__)."""
    position = jnp.arange(seq_len, dtype=jnp.float32)[:, None]                 # [S, 1]
    div_term = jnp.exp(jnp.arange(0, d_model, 2, dtype=jnp.float32)
                       * (-math.log(10000.0) / d_model))                       # [D/2]
    angles = position * div_term                                               # [S, D/2]
    pe = jnp.zeros((seq_len, d_model), dtype=jnp.float32)
    pe = pe.at[:, 0::2].set(jnp.sin(angles))
    pe = pe.at[:, 1::2].set(jnp.cos(angles))
    # batch_first=False branch: pe.unsqueeze(1) -> [seq_len, 1, d_model]
    return pe[:, None, :].astype(dtype)


# ---------------------------------------------------------------------------
# Path A: 3-D blocked broadcast add (default; dense whenever B >= sublane pack).
# ---------------------------------------------------------------------------
def _pe_add_bcast_kernel(x_ref, pe_ref, o_ref):
    # x_ref/o_ref: (tS, tB, D); pe_ref: (tS, 1, D) broadcast over the batch tile.
    o_ref[...] = x_ref[...] + pe_ref[...]


def _pe_add_3d(x, pe3):
    S, B, D = x.shape
    itemsize = jnp.dtype(x.dtype).itemsize
    pack = _sublane_pack(x.dtype)
    slab_bytes = B * D * itemsize                       # one full (B, D) slab

    if slab_bytes <= _TARGET_TILE_BYTES:
        tB = B
        tS = min(S, max(1, _TARGET_TILE_BYTES // slab_bytes))
    else:
        tS = 1
        tB = _choose_tile(B, max(pack, _TARGET_TILE_BYTES // (D * itemsize)), pack)

    # v7x megacore: non-trivial problems should give the 2 TensorCores >= 2 steps.
    if S * slab_bytes >= _MEGACORE_SPLIT_BYTES and pl.cdiv(S, tS) * pl.cdiv(B, tB) < 2:
        if S >= 2:
            tS = pl.cdiv(S, 2)
        elif B >= 2 * pack:
            tB = _round_up(pl.cdiv(B, 2), pack)

    grid = (pl.cdiv(S, tS), pl.cdiv(B, tB))
    cost = pl.CostEstimate(flops=S * B * D, transcendentals=0,
                           bytes_accessed=(2 * S * B * D + S * D) * itemsize)
    return pl.pallas_call(
        _pe_add_bcast_kernel,
        out_shape=jax.ShapeDtypeStruct((S, B, D), x.dtype),
        grid=grid,
        in_specs=[
            pl.BlockSpec((tS, tB, D), lambda i, j: (i, j, 0)),
            # pe ignores the (innermost) batch-tile axis -> block stays VMEM-resident.
            pl.BlockSpec((tS, 1, D), lambda i, j: (i, 0, 0)),
        ],
        out_specs=pl.BlockSpec((tS, tB, D), lambda i, j: (i, j, 0)),
        compiler_params=pltpu.CompilerParams(
            dimension_semantics=("parallel", "parallel"),
            vmem_limit_bytes=_VMEM_LIMIT_BYTES,
        ),
        cost_estimate=cost,
    )(x, pe3)


# ---------------------------------------------------------------------------
# Path B: folded lane-dense path for tiny batch with 128-aligned d_model.
# ---------------------------------------------------------------------------
def _pe_add_folded_kernel(x_ref, pe_ref, o_ref, *, reps):
    # x_ref/o_ref: (tS, B*D); pe_ref: (tS, D) with D % 128 == 0 and reps = B (small).
    pe = pe_ref[...]
    if reps > 1:
        pe = jnp.concatenate([pe] * reps, axis=-1)      # 128-aligned lane concat
    o_ref[...] = x_ref[...] + pe


def _pe_add_folded(x2, pe2, reps):
    S, L = x2.shape
    _, D = pe2.shape
    itemsize = jnp.dtype(x2.dtype).itemsize
    pack = _sublane_pack(x2.dtype)
    row_bytes = L * itemsize

    tS = _choose_tile(S, max(pack, _TARGET_TILE_BYTES // row_bytes), pack)
    # v7x megacore: split the (only) grid axis when the problem is non-trivial.
    if S * row_bytes >= _MEGACORE_SPLIT_BYTES and pl.cdiv(S, tS) < 2 and S > pack:
        tS = min(S, _round_up(pl.cdiv(S, 2), pack))

    grid = (pl.cdiv(S, tS),)
    cost = pl.CostEstimate(flops=S * L, transcendentals=0,
                           bytes_accessed=(2 * S * L + S * D) * itemsize)
    return pl.pallas_call(
        functools.partial(_pe_add_folded_kernel, reps=reps),
        out_shape=jax.ShapeDtypeStruct((S, L), x2.dtype),
        grid=grid,
        in_specs=[
            pl.BlockSpec((tS, L), lambda i: (i, 0)),
            pl.BlockSpec((tS, D), lambda i: (i, 0)),
        ],
        out_specs=pl.BlockSpec((tS, L), lambda i: (i, 0)),
        compiler_params=pltpu.CompilerParams(
            dimension_semantics=("parallel",),
            vmem_limit_bytes=_VMEM_LIMIT_BYTES,
        ),
        cost_estimate=cost,
    )(x2, pe2)


def positional_encoding_1d(x: jax.Array, pe: jax.Array) -> jax.Array:
    """x: [seq_len, batch, d_model]; pe: [seq_len, 1, d_model] (or [seq_len, d_model])."""
    S, B, D = x.shape
    # NOTE: add is done in x.dtype (torch keeps pe in f32; see header comment).
    pe2 = jnp.asarray(pe).reshape(S, D).astype(x.dtype)
    pack = _sublane_pack(x.dtype)

    if D % 128 == 0 and B < pack:
        # Tiny batch: fold B into the lane dim so tiles are dense (pack, 128k)
        # instead of leaving most sublanes empty.
        out2 = _pe_add_folded(x.reshape(S, B * D), pe2, reps=B)
        return out2.reshape(S, B, D)

    # General path: sublane = batch tile, lane = d_model.
    return _pe_add_3d(x, pe2.reshape(S, 1, D))


if __name__ == "__main__":
    key = jax.random.PRNGKey(0)
    k1, k2, k3 = jax.random.split(key, 3)

    # Case 1: small d_model (3-D broadcast path, lane dim < 128).
    S1, B1, D1 = 8, 2, 32
    x1 = jax.random.normal(k1, (S1, B1, D1), dtype=jnp.float32)
    pe1 = make_positional_encoding(D1, S1)
    o1 = jax.block_until_ready(positional_encoding_1d(x1, pe1))
    assert o1.shape == (S1, B1, D1)
    assert jnp.allclose(o1, x1 + pe1, atol=1e-6, rtol=1e-6)

    # Case 2: lane-aligned d_model with tiny batch (folded lane-dense path).
    S2, B2, D2 = 8, 2, 128
    x2 = jax.random.normal(k2, (S2, B2, D2), dtype=jnp.float32)
    pe2 = make_positional_encoding(D2, S2)
    o2 = jax.block_until_ready(positional_encoding_1d(x2, pe2))
    assert o2.shape == (S2, B2, D2)
    assert jnp.allclose(o2, x2 + pe2, atol=1e-6, rtol=1e-6)

    # Case 3: lane-aligned d_model, batch >= sublane pack, non-multiple-of-8 seq.
    S3, B3, D3 = 12, 16, 128
    x3 = jax.random.normal(k3, (S3, B3, D3), dtype=jnp.float32)
    pe3 = make_positional_encoding(D3, S3)
    o3 = jax.block_until_ready(positional_encoding_1d(x3, pe3))
    assert o3.shape == (S3, B3, D3)
    assert jnp.allclose(o3, x3 + pe3, atol=1e-6, rtol=1e-6)

    print("KERNEL_OK")
</pallas_src>

<mosaic_0001>
module attributes {stable_mosaic.version = 11 : i64} {
  func.func @_pe_add_bcast_kernel(%arg0: i32, %arg1: i32, %arg2: memref<8x2x32xf32, #tpu.memory_space<vmem>>, %arg3: memref<8x1x32xf32, #tpu.memory_space<vmem>>, %arg4: memref<8x2x32xf32, #tpu.memory_space<vmem>>) attributes {dimension_semantics = [#tpu.dimension_semantics<parallel>, #tpu.dimension_semantics<parallel>], iteration_bounds = array<i64: 1, 1>, scalar_prefetch = 0 : i64, scratch_operands = 0 : i64, tpu.core_type = #tpu.core_type<tc>, window_params = [{transform_indices = @transform_0, window_bounds = array<i64: 8, 2, 32>}, {transform_indices = @transform_1, window_bounds = array<i64: 8, 1, 32>}, {transform_indices = @transform_2, window_bounds = array<i64: 8, 2, 32>}]} {
    %c0 = arith.constant 0 : index
    %c0_0 = arith.constant 0 : index
    %c0_1 = arith.constant 0 : index
    %0 = vector.load %arg2[%c0, %c0_0, %c0_1] : memref<8x2x32xf32, #tpu.memory_space<vmem>>, vector<8x2x32xf32>
    %c0_2 = arith.constant 0 : index
    %c0_3 = arith.constant 0 : index
    %c0_4 = arith.constant 0 : index
    %1 = vector.load %arg3[%c0_2, %c0_3, %c0_4] : memref<8x1x32xf32, #tpu.memory_space<vmem>>, vector<8x1x32xf32>
    %2 = vector.broadcast %1 : vector<8x1x32xf32> to vector<8x2x32xf32>
    %3 = arith.addf %0, %2 : vector<8x2x32xf32>
    %c0_5 = arith.constant 0 : index
    %c0_6 = arith.constant 0 : index
    %c0_7 = arith.constant 0 : index
    %4 = vector.load %arg4[%c0_5, %c0_6, %c0_7] : memref<8x2x32xf32, #tpu.memory_space<vmem>>, vector<8x2x32xf32>
    tpu.vector_store %arg4[%c0_5, %c0_6, %c0_7], %3 {strides = array<i32>} : memref<8x2x32xf32, #tpu.memory_space<vmem>>, vector<8x2x32xf32>,
    return
  }
  func.func @transform_0(%arg0: i32, %arg1: i32) -> (i32, i32, i32) {
    %c0_i32 = arith.constant 0 : i32
    %c0_i32_0 = arith.constant 0 : i32
    return %arg0, %arg1, %c0_i32 : i32, i32, i32
  }
  func.func @transform_1(%arg0: i32, %arg1: i32) -> (i32, i32, i32) {
    %c0_i32 = arith.constant 0 : i32
    %c0_i32_0 = arith.constant 0 : i32
    %c0_i32_1 = arith.constant 0 : i32
    return %arg0, %c0_i32, %c0_i32_0 : i32, i32, i32
  }
  func.func @transform_2(%arg0: i32, %arg1: i32) -> (i32, i32, i32) {
    %c0_i32 = arith.constant 0 : i32
    %c0_i32_0 = arith.constant 0 : i32
    return %arg0, %arg1, %c0_i32 : i32, i32, i32
  }
}

</mosaic_0001>

<llo_original>
// kernel: tpu_custom_call.1
$region0: #{tpu_custom_call.1}
  #allocation0 [shape = 'u32[]', space=smem, size = 0x4, offset = 0x4, fixed_abs, tag = 'smem constant byte address 0x4 - core index']
  #allocation1 [shape = 'u32[72,128]{1,0:T(1,128)}', space=vmem, size = 0x9000, scoped, tag = 'internal scratch']
  %s0 = inlined_call_operand.hbm [shape: f32[8,2,32], index: 0, kind: input, shape index: {}]
  %s1 = inlined_call_operand.hbm [shape: f32[8,1,32], index: 1, kind: input, shape index: {}]
  %s2 = inlined_call_operand.hbm [shape: f32[8,2,32], index: 2, kind: output, shape index: {}]
  %s3 = sld [smem:[#allocation0]]
  $region26: #{tpu_custom_call.1} parent=0
    _
  %s5 = ssub.s32 1, %s3
  %s6 = scalar_select 0, %s5, %s3
  $region1: #{tpu_custom_call.1} parent=0
    #allocation2 [shape = 'u8[8192]{0}', space=vmem, size = 0x2000, scoped, tag = 'input window, operand 0, single buffered']
    #allocation3 [shape = 's32[1]{0}', space=sflag, size = 0x4, scoped, tag = 'scoped memory for tpu_custom_call.1']
    #allocation4 [shape = 's32[1]{0}', space=sflag, size = 0x4, scoped, tag = 'scoped memory for tpu_custom_call.1']
    #allocation5 [shape = 'u8[4096]{0}', space=vmem, size = 0x1000, scoped, tag = 'input window, operand 1, single buffered']
    #allocation6 [shape = 's32[1]{0}', space=sflag, size = 0x4, scoped, tag = 'scoped memory for tpu_custom_call.1']
    #allocation7 [shape = 'u8[8192]{0}', space=vmem, size = 0x2000, scoped, tag = 'output window, operand 0, single buffered']
    %7 = vsyncpa [#allocation3], 0
    %8 = vsyncpa [#allocation6], 0
    %9 = vsyncpa [#allocation4], 0
    // Predicated region
    $region2: #{tpu_custom_call.1} parent=1 // pred_check
      _
    $region3: #{tpu_custom_call.1} parent=1 // pred_check_branch
      %11 = sbr.rel (0) target = $region5
    $region4: #{tpu_custom_call.1} parent=1 // pred_region
      %13 = vsyncadd [#allocation3], 0
      %s14 = sshll.u32 %s0, 4
      %s15 = int_to_ptr.hbm [resolvable:$true] %s14
      %s16 = sshll.u32 [#allocation2], 4
      %s17 = int_to_ptr.vmem [resolvable:$true] %s16
      %22 = dma.hbm_to_vmem [thread:$0]  %s15, 256, %s17, [#allocation3], 32, 32, 2
    $region5: #{tpu_custom_call.1} parent=1 // pred_fallthru
      _
    // Predicated region
    $region6: #{tpu_custom_call.1} parent=1 // pred_check
      _
    $region7: #{tpu_custom_call.1} parent=1 // pred_check_branch
      %24 = sbr.rel (0) target = $region9
    $region8: #{tpu_custom_call.1} parent=1 // pred_region
      %26 = vsyncadd [#allocation6], 0
      %s27 = sshll.u32 %s1, 4
      %s28 = int_to_ptr.hbm [resolvable:$true] %s27
      %s29 = sshll.u32 [#allocation5], 4
      %s30 = int_to_ptr.vmem [resolvable:$true] %s29
      %35 = dma.hbm_to_vmem [thread:$0]  %s28, 128, %s30, [#allocation6], 16, 16, 1
    $region9: #{tpu_custom_call.1} parent=1 // pred_fallthru
      _
    // Predicated region
    $region10: #{tpu_custom_call.1} parent=1 // pred_check
      _
    $region11: #{tpu_custom_call.1} parent=1 // pred_check_branch
      %37 = sbr.rel (0) target = $region13
    $region12: #{tpu_custom_call.1} parent=1 // pred_region
      %39 = dma.done [#allocation3], 256
    $region13: #{tpu_custom_call.1} parent=1 // pred_fallthru
      _
    // Predicated region
    $region14: #{tpu_custom_call.1} parent=1 // pred_check
      _
    $region15: #{tpu_custom_call.1} parent=1 // pred_check_branch
      %41 = sbr.rel (0) target = $region17
    $region16: #{tpu_custom_call.1} parent=1 // pred_region
      %43 = dma.done [#allocation6], 128
    $region17: #{tpu_custom_call.1} parent=1 // pred_fallthru
      _
    %v44 = vld [vmem:[#allocation2] sm:$0x3]
    %v45 = vld [vmem:[#allocation2 + $0x2] sm:$0x3]
    %v46 = vld [vmem:[#allocation2 + $0x4] sm:$0x3]
    %v47 = vld [vmem:[#allocation2 + $0x6] sm:$0x3]
    %v48 = vld [vmem:[#allocation2 + $0x8] sm:$0x3]
    %v49 = vld [vmem:[#allocation2 + $0xa] sm:$0x3]
    %v50 = vld [vmem:[#allocation2 + $0xc] sm:$0x3]
    %v51 = vld [vmem:[#allocation2 + $0xe] sm:$0x3]
    %v52 = vld [vmem:[#allocation5] sm:$0x1]
    %v53 = vld [vmem:[#allocation5 + $0x1] sm:$0x1]
    %v54 = vld [vmem:[#allocation5 + $0x2] sm:$0x1]
    %v55 = vld [vmem:[#allocation5 + $0x3] sm:$0x1]
    %v56 = vld [vmem:[#allocation5 + $0x4] sm:$0x1]
    %v57 = vld [vmem:[#allocation5 + $0x5] sm:$0x1]
    %v58 = vld [vmem:[#allocation5 + $0x6] sm:$0x1]
    %v59 = vld [vmem:[#allocation5 + $0x7] sm:$0x1]
    %v68 = vperm.slane %v52, 0
    %v69 = vperm.slane %v53, 0
    %v70 = vperm.slane %v54, 0
    %v71 = vperm.slane %v55, 0
    %v72 = vperm.slane %v56, 0
    %v73 = vperm.slane %v57, 0
    %v74 = vperm.slane %v58, 0
    %v75 = vperm.slane %v59, 0
    %v84 = vadd.f32 %v44, %v68
    %v85 = vadd.f32 %v45, %v69
    %v86 = vadd.f32 %v46, %v70
    %v87 = vadd.f32 %v47, %v71
    %v88 = vadd.f32 %v48, %v72
    %v89 = vadd.f32 %v49, %v73
    %v90 = vadd.f32 %v50, %v74
    %v91 = vadd.f32 %v51, %v75
    %vm92 = vcmask 254976
    %93 = vst.msk [vmem:[#allocation7] sm:$0x3] %vm92, %v84
    %94 = vst.msk [vmem:[#allocation7 + $0x2] sm:$0x3] %vm92, %v85
    %95 = vst.msk [vmem:[#allocation7 + $0x4] sm:$0x3] %vm92, %v86
    %96 = vst.msk [vmem:[#allocation7 + $0x6] sm:$0x3] %vm92, %v87
    %97 = vst.msk [vmem:[#allocation7 + $0x8] sm:$0x3] %vm92, %v88
    %98 = vst.msk [vmem:[#allocation7 + $0xa] sm:$0x3] %vm92, %v89
    %99 = vst.msk [vmem:[#allocation7 + $0xc] sm:$0x3] %vm92, %v90
    %100 = vst.msk [vmem:[#allocation7 + $0xe] sm:$0x3] %vm92, %v91
    // Predicated region
    $region18: #{tpu_custom_call.1} parent=1 // pred_check
      _
    $region19: #{tpu_custom_call.1} parent=1 // pred_check_branch
      %102 = sbr.rel (0) target = $region21
    $region20: #{tpu_custom_call.1} parent=1 // pred_region
      %104 = vsyncadd [#allocation4], 0
      %s105 = sshll.u32 [#allocation7], 4
      %s106 = int_to_ptr.vmem [resolvable:$true] %s105
      %s107 = sshll.u32 %s2, 4
      %s108 = int_to_ptr.hbm [resolvable:$true] %s107
      %113 = dma.vmem_to_hbm [thread:$0]  %s106, 256, %s108, [#allocation4], 32, 32, 2
    $region21: #{tpu_custom_call.1} parent=1 // pred_fallthru
      _
    // Predicated region
    $region22: #{tpu_custom_call.1} parent=1 // pred_check
      _
    $region23: #{tpu_custom_call.1} parent=1 // pred_check_branch
      %115 = sbr.rel (0) target = $region25
    $region24: #{tpu_custom_call.1} parent=1 // pred_region
      %117 = dma.done [#allocation4], 256
    $region25: #{tpu_custom_call.1} parent=1 // pred_fallthru
      _
    %118 = vsyncpa [#allocation3], 1
    %119 = vsyncpa [#allocation6], 1
    %120 = vsyncpa [#allocation4], 1

</llo_original>
